<compile_context>
chip_gen: v5e
topology: v5e:2x2
jax: 0.10.0
libtpu: 0.0.40
codegen_flags: <defaults>
</compile_context>

<pallas_src>
import math
import functools

import jax
import jax.numpy as jnp
from jax.experimental import pallas as pl
from jax.experimental.pallas import tpu as pltpu

_INV_SQRT2 = 1.0 / math.sqrt(2.0)


def _round_up(a: int, b: int) -> int:
    return ((a + b - 1) // b) * b


def _mlp_kernel(x_ref, w1_ref, b1_ref, w2_ref, b2_ref, o_ref, acc_ref):
    # x_ref:  (tm, D_in)        bf16 token tile (same block for every k step)
    # w1_ref: (D_in, tk)        bf16 fc1 weight K-slice
    # b1_ref: (1, tk)           f32  fc1 bias K-slice
    # w2_ref: (tk, D_out_pad)   bf16 fc2 weight K-slice
    # b2_ref: (1, D_out_pad)    f32  fc2 bias
    # o_ref:  (tm, D_out_pad)   output tile (written on last k step)
    # acc_ref:(tm, D_out_pad)   f32 accumulator scratch
    k = pl.program_id(1)

    @pl.when(k == 0)
    def _():
        acc_ref[...] = jnp.zeros_like(acc_ref)

    # fc1 partial: full D_in contraction into this K-slice of the hidden dim (MXU, f32 acc).
    h = jnp.dot(x_ref[...], w1_ref[...], preferred_element_type=jnp.float32)
    h = h + b1_ref[...]
    # exact erf-based GELU (matches torch.nn.GELU() default), computed in f32.
    h = 0.5 * h * (1.0 + jax.lax.erf(h * _INV_SQRT2))
    # dropout p=0.0 is the identity -> no-op.
    # fc2 partial product, accumulated in f32 scratch.
    acc_ref[...] += jnp.dot(h.astype(w2_ref.dtype), w2_ref[...],
                            preferred_element_type=jnp.float32)

    @pl.when(k == pl.num_programs(1) - 1)
    def _():
        o_ref[...] = (acc_ref[...] + b2_ref[...]).astype(o_ref.dtype)


@functools.partial(jax.jit, static_argnames=("tile_m", "tile_k", "compute_dtype"))
def mlp_pallas(x, w1, b1, w2, b2, *, tile_m=256, tile_k=512,
               compute_dtype=jnp.bfloat16):
    """x: (..., D_in). Returns (..., D_out) in x.dtype."""
    lead_shape = x.shape[:-1]
    D_in = x.shape[-1]
    D_hid = w1.shape[1]
    D_out = w2.shape[1]
    M = int(math.prod(lead_shape)) if lead_shape else 1
    out_dtype = x.dtype

    # ---- M (token) tiling: shrink the tile for tiny inputs, pad otherwise ----
    tm = _round_up(min(tile_m, _round_up(M, 8)), 8)
    M_pad = _round_up(M, tm)

    # ---- hidden-dim (K) tiling: stream weight slices, keep tk lane-aligned ----
    if D_hid <= tile_k:
        tk = D_hid                      # full hidden dim in one step
    else:
        tk = _round_up(tile_k, 128)
    D_hid_pad = _round_up(D_hid, tk)

    # ---- lane-dense output: pad D_out up to a multiple of 128 lanes ----
    D_out_pad = _round_up(D_out, 128)

    # ---- prepare operands (bf16 matmul inputs, f32 biases) ----
    x2d = x.reshape(M, D_in).astype(compute_dtype)
    if M_pad != M:
        x2d = jnp.pad(x2d, ((0, M_pad - M), (0, 0)))

    w1p = w1.astype(compute_dtype)
    w2p = w2.astype(compute_dtype)
    b1p = b1.astype(jnp.float32).reshape(1, D_hid)
    b2p = b2.astype(jnp.float32).reshape(1, D_out)
    if D_hid_pad != D_hid:
        w1p = jnp.pad(w1p, ((0, 0), (0, D_hid_pad - D_hid)))
        b1p = jnp.pad(b1p, ((0, 0), (0, D_hid_pad - D_hid)))
        w2p = jnp.pad(w2p, ((0, D_hid_pad - D_hid), (0, 0)))
    if D_out_pad != D_out:
        w2p = jnp.pad(w2p, ((0, 0), (0, D_out_pad - D_out)))
        b2p = jnp.pad(b2p, ((0, 0), (0, D_out_pad - D_out)))

    grid = (M_pad // tm, D_hid_pad // tk)

    itemsize = jnp.dtype(compute_dtype).itemsize
    cost = pl.CostEstimate(
        flops=2 * M_pad * (D_in * D_hid_pad + D_hid_pad * D_out_pad),
        transcendentals=M_pad * D_hid_pad,
        bytes_accessed=int(
            M_pad * D_in * itemsize
            + D_in * D_hid_pad * itemsize
            + D_hid_pad * D_out_pad * itemsize
            + (D_hid_pad + D_out_pad) * 4
            + M_pad * D_out_pad * jnp.dtype(out_dtype).itemsize
        ),
    )

    out2d = pl.pallas_call(
        _mlp_kernel,
        out_shape=jax.ShapeDtypeStruct((M_pad, D_out_pad), out_dtype),
        grid_spec=pltpu.PrefetchScalarGridSpec(
            num_scalar_prefetch=0,
            grid=grid,
            in_specs=[
                pl.BlockSpec((tm, D_in), lambda i, k: (i, 0)),        # x tile
                pl.BlockSpec((D_in, tk), lambda i, k: (0, k)),        # fc1 W K-slice
                pl.BlockSpec((1, tk), lambda i, k: (0, k)),           # fc1 b K-slice
                pl.BlockSpec((tk, D_out_pad), lambda i, k: (k, 0)),   # fc2 W K-slice
                pl.BlockSpec((1, D_out_pad), lambda i, k: (0, 0)),    # fc2 b
            ],
            out_specs=pl.BlockSpec((tm, D_out_pad), lambda i, k: (i, 0)),
            scratch_shapes=[pltpu.VMEM((tm, D_out_pad), jnp.float32)],
        ),
        compiler_params=pltpu.CompilerParams(
            dimension_semantics=("parallel", "arbitrary"),
            vmem_limit_bytes=64 * 1024 * 1024,
        ),
        cost_estimate=cost,
    )(x2d, w1p, b1p, w2p, b2p)

    return out2d[:M, :D_out].reshape(*lead_shape, D_out)


def mlp_reference_f32(x, w1, b1, w2, b2):
    h = jnp.dot(x, w1) + b1
    h = 0.5 * h * (1.0 + jax.lax.erf(h * _INV_SQRT2))
    return jnp.dot(h, w2) + b2


def mlp_reference_bf16(x, w1, b1, w2, b2):
    # Mirrors the kernel's precision choices (bf16 matmul inputs, f32 accumulation).
    xd = x.astype(jnp.bfloat16)
    h = jnp.dot(xd, w1.astype(jnp.bfloat16),
                preferred_element_type=jnp.float32) + b1.astype(jnp.float32)
    h = 0.5 * h * (1.0 + jax.lax.erf(h * _INV_SQRT2))
    out = jnp.dot(h.astype(jnp.bfloat16), w2.astype(jnp.bfloat16),
                  preferred_element_type=jnp.float32) + b2.astype(jnp.float32)
    return out.astype(x.dtype)


if __name__ == "__main__":
    key = jax.random.PRNGKey(0)
    B, N = 2, 8                     # batch, sequence length
    D_in, D_hid, D_out = 32, 64, 32

    k_x, k_w1, k_b1, k_w2, k_b2 = jax.random.split(key, 5)

    x = jax.random.normal(k_x, (B, N, D_in), dtype=jnp.float32)

    # deterministic parameter init (mimics torch.nn.Linear uniform bounds)
    bound1 = 1.0 / math.sqrt(D_in)
    w1 = jax.random.uniform(k_w1, (D_in, D_hid), minval=-bound1, maxval=bound1,
                            dtype=jnp.float32)
    b1 = jax.random.uniform(k_b1, (D_hid,), minval=-bound1, maxval=bound1,
                            dtype=jnp.float32)
    bound2 = 1.0 / math.sqrt(D_hid)
    w2 = jax.random.uniform(k_w2, (D_hid, D_out), minval=-bound2, maxval=bound2,
                            dtype=jnp.float32)
    b2 = jax.random.uniform(k_b2, (D_out,), minval=-bound2, maxval=bound2,
                            dtype=jnp.float32)

    out = mlp_pallas(x, w1, b1, w2, b2)
    jax.block_until_ready(out)

    assert out.shape == (B, N, D_out)

    ref_bf16 = mlp_reference_bf16(x, w1, b1, w2, b2)
    ref_f32 = mlp_reference_f32(x, w1, b1, w2, b2)
    # Tight vs precision-matched reference; looser vs pure-f32 reference (bf16 rounding).
    assert jnp.allclose(out, ref_bf16, atol=1e-2, rtol=1e-2), "mismatch vs bf16-matched reference"
    assert jnp.allclose(out, ref_f32, atol=7e-2, rtol=7e-2), "mismatch vs f32 reference"

    print("KERNEL_OK")
</pallas_src>

<mosaic_0001>
module attributes {stable_mosaic.version = 11 : i64} {
  func.func @_mlp_kernel(%arg0: i32, %arg1: i32, %arg2: memref<16x32xbf16, #tpu.memory_space<vmem>>, %arg3: memref<32x64xbf16, #tpu.memory_space<vmem>>, %arg4: memref<1x64xf32, #tpu.memory_space<vmem>>, %arg5: memref<64x128xbf16, #tpu.memory_space<vmem>>, %arg6: memref<1x128xf32, #tpu.memory_space<vmem>>, %arg7: memref<16x128xf32, #tpu.memory_space<vmem>>, %arg8: memref<16x128xf32, #tpu.memory_space<vmem>>) attributes {dimension_semantics = [#tpu.dimension_semantics<parallel>, #tpu.dimension_semantics<arbitrary>], iteration_bounds = array<i64: 1, 1>, scalar_prefetch = 0 : i64, scratch_operands = 1 : i64, tpu.core_type = #tpu.core_type<tc>, window_params = [{transform_indices = @transform_0, window_bounds = array<i64: 16, 32>}, {transform_indices = @transform_1, window_bounds = array<i64: 32, 64>}, {transform_indices = @transform_2, window_bounds = array<i64: 1, 64>}, {transform_indices = @transform_3, window_bounds = array<i64: 64, 128>}, {pipeline_mode = #tpu.pipeline_mode<synchronous>, transform_indices = @transform_4, window_bounds = array<i64: 1, 128>}, {transform_indices = @transform_5, window_bounds = array<i64: 16, 128>}]} {
    %c0_i32 = arith.constant 0 : i32
    %0 = arith.cmpi eq, %arg1, %c0_i32 : i32
    %1 = arith.extui %0 : i1 to i32
    %c0_i32_0 = arith.constant 0 : i32
    %2 = arith.cmpi ne, %1, %c0_i32_0 : i32
    scf.if %2 {
      %cst_18 = arith.constant 0.000000e+00 : f32
      %26 = vector.broadcast %cst_18 : f32 to vector<16x128xf32>
      %c0_19 = arith.constant 0 : index
      %c0_20 = arith.constant 0 : index
      %27 = vector.load %arg8[%c0_19, %c0_20] : memref<16x128xf32, #tpu.memory_space<vmem>>, vector<16x128xf32>
      tpu.vector_store %arg8[%c0_19, %c0_20], %26 {strides = array<i32>} : memref<16x128xf32, #tpu.memory_space<vmem>>, vector<16x128xf32>,
    } else {
    }
    %c0 = arith.constant 0 : index
    %c0_1 = arith.constant 0 : index
    %3 = vector.load %arg2[%c0, %c0_1] : memref<16x32xbf16, #tpu.memory_space<vmem>>, vector<16x32xbf16>
    %c0_2 = arith.constant 0 : index
    %c0_3 = arith.constant 0 : index
    %4 = vector.load %arg3[%c0_2, %c0_3] : memref<32x64xbf16, #tpu.memory_space<vmem>>, vector<32x64xbf16>
    %cst = arith.constant dense<0.000000e+00> : vector<16x64xf32>
    %5 = tpu.matmul %3, %4, %cst {dimension_numbers = #tpu.dot_dimension_numbers<[1], [0], [0], [1], [0, 0, 1, 1], [], []>} : vector<16x32xbf16>, vector<32x64xbf16>, vector<16x64xf32> -> vector<16x64xf32>
    %c0_4 = arith.constant 0 : index
    %c0_5 = arith.constant 0 : index
    %6 = vector.load %arg4[%c0_4, %c0_5] : memref<1x64xf32, #tpu.memory_space<vmem>>, vector<1x64xf32>
    %7 = vector.broadcast %6 : vector<1x64xf32> to vector<16x64xf32>
    %8 = arith.addf %5, %7 : vector<16x64xf32>
    %cst_6 = arith.constant 5.000000e-01 : f32
    %9 = vector.broadcast %cst_6 : f32 to vector<16x64xf32>
    %10 = arith.mulf %9, %8 : vector<16x64xf32>
    %cst_7 = arith.constant 0.707106769 : f32
    %11 = vector.broadcast %cst_7 : f32 to vector<16x64xf32>
    %12 = arith.mulf %8, %11 : vector<16x64xf32>
    %13 = math.erf %12 : vector<16x64xf32>
    %cst_8 = arith.constant 1.000000e+00 : f32
    %14 = vector.broadcast %cst_8 : f32 to vector<16x64xf32>
    %15 = arith.addf %14, %13 : vector<16x64xf32>
    %16 = arith.mulf %10, %15 : vector<16x64xf32>
    %c0_9 = arith.constant 0 : index
    %c0_10 = arith.constant 0 : index
    %17 = vector.load %arg8[%c0_9, %c0_10] : memref<16x128xf32, #tpu.memory_space<vmem>>, vector<16x128xf32>
    %18 = arith.truncf %16 : vector<16x64xf32> to vector<16x64xbf16>
    %c0_11 = arith.constant 0 : index
    %c0_12 = arith.constant 0 : index
    %19 = vector.load %arg5[%c0_11, %c0_12] : memref<64x128xbf16, #tpu.memory_space<vmem>>, vector<64x128xbf16>
    %cst_13 = arith.constant dense<0.000000e+00> : vector<16x128xf32>
    %20 = tpu.matmul %18, %19, %cst_13 {dimension_numbers = #tpu.dot_dimension_numbers<[1], [0], [0], [1], [0, 0, 1, 1], [], []>} : vector<16x64xbf16>, vector<64x128xbf16>, vector<16x128xf32> -> vector<16x128xf32>
    %21 = arith.addf %17, %20 : vector<16x128xf32>
    %c0_14 = arith.constant 0 : index
    %c0_15 = arith.constant 0 : index
    %22 = vector.load %arg8[%c0_14, %c0_15] : memref<16x128xf32, #tpu.memory_space<vmem>>, vector<16x128xf32>
    tpu.vector_store %arg8[%c0_14, %c0_15], %21 {strides = array<i32>} : memref<16x128xf32, #tpu.memory_space<vmem>>, vector<16x128xf32>,
    %c0_i32_16 = arith.constant 0 : i32
    %23 = arith.cmpi eq, %arg1, %c0_i32_16 : i32
    %24 = arith.extui %23 : i1 to i32
    %c0_i32_17 = arith.constant 0 : i32
    %25 = arith.cmpi ne, %24, %c0_i32_17 : i32
    scf.if %25 {
      %c0_18 = arith.constant 0 : index
      %c0_19 = arith.constant 0 : index
      %26 = vector.load %arg8[%c0_18, %c0_19] : memref<16x128xf32, #tpu.memory_space<vmem>>, vector<16x128xf32>
      %c0_20 = arith.constant 0 : index
      %c0_21 = arith.constant 0 : index
      %27 = vector.load %arg6[%c0_20, %c0_21] : memref<1x128xf32, #tpu.memory_space<vmem>>, vector<1x128xf32>
      %28 = vector.broadcast %27 : vector<1x128xf32> to vector<16x128xf32>
      %29 = arith.addf %26, %28 : vector<16x128xf32>
      %c0_22 = arith.constant 0 : index
      %c0_23 = arith.constant 0 : index
      %30 = vector.load %arg7[%c0_22, %c0_23] : memref<16x128xf32, #tpu.memory_space<vmem>>, vector<16x128xf32>
      tpu.vector_store %arg7[%c0_22, %c0_23], %29 {strides = array<i32>} : memref<16x128xf32, #tpu.memory_space<vmem>>, vector<16x128xf32>,
    } else {
    }
    return
  }
  func.func @transform_0(%arg0: i32, %arg1: i32) -> (i32, i32) {
    %c0_i32 = arith.constant 0 : i32
    %c0_i32_0 = arith.constant 0 : i32
    return %arg0, %c0_i32 : i32, i32
  }
  func.func @transform_1(%arg0: i32, %arg1: i32) -> (i32, i32) {
    %c0_i32 = arith.constant 0 : i32
    %c0_i32_0 = arith.constant 0 : i32
    return %c0_i32, %arg1 : i32, i32
  }
  func.func @transform_2(%arg0: i32, %arg1: i32) -> (i32, i32) {
    %c0_i32 = arith.constant 0 : i32
    %c0_i32_0 = arith.constant 0 : i32
    return %c0_i32, %arg1 : i32, i32
  }
  func.func @transform_3(%arg0: i32, %arg1: i32) -> (i32, i32) {
    %c0_i32 = arith.constant 0 : i32
    %c0_i32_0 = arith.constant 0 : i32
    return %arg1, %c0_i32 : i32, i32
  }
  func.func @transform_4(%arg0: i32, %arg1: i32) -> (i32, i32) {
    %c0_i32 = arith.constant 0 : i32
    %c0_i32_0 = arith.constant 0 : i32
    %c0_i32_1 = arith.constant 0 : i32
    return %c0_i32, %c0_i32_0 : i32, i32
  }
  func.func @transform_5(%arg0: i32, %arg1: i32) -> (i32, i32) {
    %c0_i32 = arith.constant 0 : i32
    %c0_i32_0 = arith.constant 0 : i32
    return %arg0, %c0_i32 : i32, i32
  }
}

</mosaic_0001>

<llo_original>
// kernel: mlp_pallas.1
$region0: #{mlp_pallas.1}
  #allocation0 [shape = 'u32[]', space=smem, size = 0x4, offset = 0x4, fixed_abs, tag = 'smem constant byte address 0x4 - core index']
  #allocation1 [shape = 'u32[72,128]{1,0:T(1,128)}', space=vmem, size = 0x9000, scoped, tag = 'internal scratch']
  #allocation2 [shape = 'f32[16,128]{1,0:T(8,128)}', space=vmem, size = 0x2000, scoped, tag = 'scratch operand']
  %s0 = inlined_call_operand.vmem [shape: bf16[16,32], index: 0, kind: input, shape index: {}]
  %s1 = inlined_call_operand.vmem [shape: bf16[32,64], index: 1, kind: input, shape index: {}]
  %s2 = inlined_call_operand.vmem [shape: f32[1,64], index: 2, kind: input, shape index: {}]
  %s3 = inlined_call_operand.vmem [shape: bf16[64,128], index: 3, kind: input, shape index: {}]
  %s4 = inlined_call_operand.vmem [shape: f32[1,128], index: 4, kind: input, shape index: {}]
  %s5 = inlined_call_operand.vmem [shape: f32[16,128], index: 5, kind: output, shape index: {}]
  %s6 = sld [smem:[#allocation0]]
  $region38: #{mlp_pallas.1} parent=0
    _
  %s8 = ssub.s32 1, %s6
  %s9 = scalar_select 0, %s8, %s6
  // Predicated region
  $region2: #{mlp_pallas.1} parent=0 // pred_check
    _
  $region3: #{mlp_pallas.1} parent=0 // pred_check_branch
    %11 = sbr.rel (0) target = $region5
  $region4: #{mlp_pallas.1} parent=0 // pred_region
    _
  $region5: #{mlp_pallas.1} parent=0 // pred_fallthru
    _
  // Predicated region
  $region6: #{mlp_pallas.1} parent=0 // pred_check
    _
  $region7: #{mlp_pallas.1} parent=0 // pred_check_branch
    %13 = sbr.rel (0) target = $region9
  $region8: #{mlp_pallas.1} parent=0 // pred_region
    _
  $region9: #{mlp_pallas.1} parent=0 // pred_fallthru
    _
  // Predicated region
  $region10: #{mlp_pallas.1} parent=0 // pred_check
    _
  $region11: #{mlp_pallas.1} parent=0 // pred_check_branch
    %15 = sbr.rel (0) target = $region13
  $region12: #{mlp_pallas.1} parent=0 // pred_region
    _
  $region13: #{mlp_pallas.1} parent=0 // pred_fallthru
    _
  // Predicated region
  $region14: #{mlp_pallas.1} parent=0 // pred_check
    _
  $region15: #{mlp_pallas.1} parent=0 // pred_check_branch
    %17 = sbr.rel (0) target = $region17
  $region16: #{mlp_pallas.1} parent=0 // pred_region
    _
  $region17: #{mlp_pallas.1} parent=0 // pred_fallthru
    _
  // Predicated region
  $region18: #{mlp_pallas.1} parent=0 // pred_check
    _
  $region19: #{mlp_pallas.1} parent=0 // pred_check_branch
    %19 = sbr.rel (0) target = $region21
  $region20: #{mlp_pallas.1} parent=0 // pred_region
    _
  $region21: #{mlp_pallas.1} parent=0 // pred_fallthru
    _
  %p21 = scmp.eq.s32.totalorder 0, 0
  // Predicated region
  $region22: #{mlp_pallas.1} parent=0 // pred_check
    %p22 = pneg %p21
  $region23: #{mlp_pallas.1} parent=0 // pred_check_branch
    %24 = sbr.rel (%p22) target = $region25
  $region24: #{mlp_pallas.1} parent=0 // pred_region
    %25 = vst [vmem:[#allocation2] sm:$0xff] 0.0
    %26 = vst [vmem:[#allocation2 + $0x8] sm:$0xff] 0.0
  $region25: #{mlp_pallas.1} parent=0 // pred_fallthru
    _
  %v27 = vld [vmem:[%s0] sm:$0xf]
  %v28 = vld [vmem:[%s0 + $0x4] sm:$0xf]
  %v29 = vld [vmem:[%s1] sm:$0xf]
  %v30 = vld [vmem:[%s1 + $0x4] sm:$0xf]
  %v31 = vld [vmem:[%s1 + $0x8] sm:$0xf]
  %v32 = vld [vmem:[%s1 + $0xc] sm:$0xf]
  %v33 = vld [vmem:[%s2] sm:$0x1]
  %v35 = vperm.slane %v33, 0
  %v39 = vunpack.c.l.b16 %v27
  %v40 = vunpack.c.l.b16 %v28
  %v41 = vpack.c.b16 %v40, %v39
  %v46 = vunpack.c.l.b16 %v29
  %v47 = vunpack.c.l.b16 %v30
  %v48 = vunpack.c.l.b16 %v31
  %v49 = vunpack.c.l.b16 %v32
  %v50 = vpack.c.b16 %v47, %v46
  %v51 = vpack.c.b16 %v49, %v48
  %vm54 = vcmask 261120
  %v56 = vsel %vm54, %v41, 0
  %58 = vmatpush.bf16.msra.mxu0 0
  %59 = vmatpush.bf16.msra.mxu0 0
  %60 = vmatpush.bf16.msra.mxu0 0
  %61 = vmatpush.bf16.msra.mxu0 0
  %62 = vmatpush.bf16.msra.mxu0 0
  %63 = vmatpush.bf16.msra.mxu0 0
  %64 = vmatpush.bf16.msra.mxu0 %v51
  %65 = vmatpush.bf16.msra.mxu0 %v50
  %66 = vmatmul.bf16.gmra.mxu0 %v56
  %v67 = vpop.f32.mrf.mxu0
  %v68 = vadd.f32 %v35, %v67
  %v69 = vpop.f32.mrf.mxu0
  %v70 = vadd.f32 %v35, %v69
  %71 = vdwg.mxu0
  %v72 = vmul.f32 %v68, 0.5
  %v73 = vmul.f32 %v70, 0.5
  %v74 = vmul.f32 %v68, 0.70710677
  %v75 = vmul.f32 %v70, 0.70710677
  %v76 = vmul.f32 %v74, %v74
  %v77 = vmin.f32 16.0, %v76
  %v78 = vmul.f32 %v77, 2.1237322e-06
  %v79 = vadd.f32 %v78, 0.00028619796
  %v80 = vmul.f32 %v77, %v79
  %v81 = vadd.f32 %v80, 0.0036580483
  %v82 = vmul.f32 %v77, %v81
  %v83 = vadd.f32 %v82, 0.05243302
  %v84 = vmul.f32 %v77, %v83
  %v85 = vadd.f32 %v84, 0.18741608
  %v86 = vmul.f32 %v77, %v85
  %v87 = vadd.f32 %v86, 1.1283791
  %v88 = vmul.f32 %v74, %v87
  %v89 = vmul.f32 %v77, 3.8918573e-05
  %v90 = vadd.f32 %v89, 0.001143296
  %v91 = vmul.f32 %v77, %v90
  %v92 = vadd.f32 %v91, 0.014752088
  %v93 = vmul.f32 %v77, %v92
  %v94 = vadd.f32 %v93, 0.112945676
  %v95 = vmul.f32 %v77, %v94
  %v96 = vadd.f32 %v95, 0.4994258
  %v97 = vmul.f32 %v77, %v96
  %v98 = vadd.f32 %v97, 1.0
  %v99 = vrcp.pop %v98
  %v100 = vmul.f32 %v98, %v99
  %v101 = vsub.f32 1.0, %v100
  %v102 = vmul.f32 %v99, %v101
  %v103 = vadd.f32 %v99, %v102
  %vm104 = vweird.f32 %v98
  %vm105 = vweird.f32 %v99
  %vm106 = vmor %vm104, %vm105
  %v107 = vsel %vm106, %v99, %v103
  %v108 = vand.u32 2147483647, %v98
  %vm109 = vcmp.eq.f32.partialorder %v108, 8.507059e+37
  %v110 = vand.u32 %v98, 2147483648
  %v111 = vor.u32 1.1754944e-38, %v110
  %v112 = vsel %vm109, %v111, %v107
  %v113 = vmul.f32 %v88, %v112
  %v114 = vmin.f32 %v113, 1.0
  %v115 = vmax.f32 %v114, -1.0
  %v116 = vmul.f32 %v75, %v75
  %v117 = vmin.f32 16.0, %v116
  %v118 = vmul.f32 %v117, 2.1237322e-06
  %v119 = vadd.f32 %v118, 0.00028619796
  %v120 = vmul.f32 %v117, %v119
  %v121 = vadd.f32 %v120, 0.0036580483
  %v122 = vmul.f32 %v117, %v121
  %v123 = vadd.f32 %v122, 0.05243302
  %v124 = vmul.f32 %v117, %v123
  %v125 = vadd.f32 %v124, 0.18741608
  %v126 = vmul.f32 %v117, %v125
  %v127 = vadd.f32 %v126, 1.1283791
  %v128 = vmul.f32 %v75, %v127
  %v129 = vmul.f32 %v117, 3.8918573e-05
  %v130 = vadd.f32 %v129, 0.001143296
  %v131 = vmul.f32 %v117, %v130
  %v132 = vadd.f32 %v131, 0.014752088
  %v133 = vmul.f32 %v117, %v132
  %v134 = vadd.f32 %v133, 0.112945676
  %v135 = vmul.f32 %v117, %v134
  %v136 = vadd.f32 %v135, 0.4994258
  %v137 = vmul.f32 %v117, %v136
  %v138 = vadd.f32 %v137, 1.0
  %v139 = vrcp.pop %v138
  %v140 = vmul.f32 %v138, %v139
  %v141 = vsub.f32 1.0, %v140
  %v142 = vmul.f32 %v139, %v141
  %v143 = vadd.f32 %v139, %v142
  %vm144 = vweird.f32 %v138
  %vm145 = vweird.f32 %v139
  %vm146 = vmor %vm144, %vm145
  %v147 = vsel %vm146, %v139, %v143
  %v148 = vand.u32 2147483647, %v138
  %vm149 = vcmp.eq.f32.partialorder %v148, 8.507059e+37
  %v150 = vand.u32 %v138, 2147483648
  %v151 = vor.u32 1.1754944e-38, %v150
  %v152 = vsel %vm149, %v151, %v147
  %v153 = vmul.f32 %v128, %v152
  %v154 = vmin.f32 %v153, 1.0
  %v155 = vmax.f32 %v154, -1.0
  %v156 = vadd.f32 %v115, 1.0
  %v157 = vadd.f32 %v155, 1.0
  %v158 = vmul.f32 %v72, %v156
  %v159 = vmul.f32 %v73, %v157
  %v160 = vld [vmem:[#allocation2] sm:$0xff]
  %v161 = vld [vmem:[#allocation2 + $0x8] sm:$0xff]
  %v162 = vpack.c.bf16 %v159, %v158
  %v163 = vld [vmem:[%s3] sm:$0xf]
  %v164 = vld [vmem:[%s3 + $0x4] sm:$0xf]
  %v165 = vld [vmem:[%s3 + $0x8] sm:$0xf]
  %v166 = vld [vmem:[%s3 + $0xc] sm:$0xf]
  %v167 = vld [vmem:[%s3 + $0x10] sm:$0xf]
  %v168 = vld [vmem:[%s3 + $0x14] sm:$0xf]
  %v169 = vld [vmem:[%s3 + $0x18] sm:$0xf]
  %v170 = vld [vmem:[%s3 + $0x1c] sm:$0xf]
  %v179 = vunpack.c.l.b16 %v163
  %v180 = vunpack.c.l.b16 %v164
  %v181 = vunpack.c.l.b16 %v165
  %v182 = vunpack.c.l.b16 %v166
  %v183 = vunpack.c.l.b16 %v167
  %v184 = vunpack.c.l.b16 %v168
  %v185 = vunpack.c.l.b16 %v169
  %v186 = vunpack.c.l.b16 %v170
  %v187 = vpack.c.b16 %v180, %v179
  %v188 = vpack.c.b16 %v182, %v181
  %v189 = vpack.c.b16 %v184, %v183
  %v190 = vpack.c.b16 %v186, %v185
  %vm195 = vcmask 523264
  %v197 = vsel %vm195, %v162, 0
  %199 = vmatpush.bf16.msra.mxu0 0
  %200 = vmatpush.bf16.msra.mxu0 0
  %201 = vmatpush.bf16.msra.mxu0 0
  %202 = vmatpush.bf16.msra.mxu0 0
  %203 = vmatpush.bf16.msra.mxu0 %v190
  %204 = vmatpush.bf16.msra.mxu0 %v189
  %205 = vmatpush.bf16.msra.mxu0 %v188
  %206 = vmatpush.bf16.msra.mxu0 %v187
  %207 = vmatmul.bf16.gmra.mxu0 %v197
  %v208 = vpop.f32.mrf.mxu0
  %v209 = vadd.f32 0.0, %v208
  %v210 = vpop.f32.mrf.mxu0
  %v211 = vadd.f32 0.0, %v210
  %212 = vdwg.mxu0
  %v213 = vadd.f32 %v160, %v209
  %v214 = vadd.f32 %v161, %v211
  %215 = vst [vmem:[#allocation2] sm:$0xff] %v213
  %216 = vst [vmem:[#allocation2 + $0x8] sm:$0xff] %v214
  // Predicated region
  $region26: #{mlp_pallas.1} parent=0 // pred_check
    %p217 = pneg %p21
  $region27: #{mlp_pallas.1} parent=0 // pred_check_branch
    %219 = sbr.rel (%p217) target = $region29
  $region28: #{mlp_pallas.1} parent=0 // pred_region
    %v220 = vld [vmem:[#allocation2] sm:$0xff]
    %v221 = vld [vmem:[#allocation2 + $0x8] sm:$0xff]
    %v222 = vld [vmem:[%s4] sm:$0x1]
    %v224 = vperm.slane %v222, 0
    %v226 = vadd.f32 %v220, %v224
    %v227 = vadd.f32 %v221, %v224
    %228 = vst [vmem:[%s5] sm:$0xff] %v226
    %229 = vst [vmem:[%s5 + $0x8] sm:$0xff] %v227
  $region29: #{mlp_pallas.1} parent=0 // pred_fallthru
    _
  // Predicated region
  $region30: #{mlp_pallas.1} parent=0 // pred_check
    _
  $region31: #{mlp_pallas.1} parent=0 // pred_check_branch
    %231 = sbr.rel (0) target = $region33
  $region32: #{mlp_pallas.1} parent=0 // pred_region
    _
  $region33: #{mlp_pallas.1} parent=0 // pred_fallthru
    _
  // Predicated region
  $region34: #{mlp_pallas.1} parent=0 // pred_check
    _
  $region35: #{mlp_pallas.1} parent=0 // pred_check_branch
    %233 = sbr.rel (0) target = $region37
  $region36: #{mlp_pallas.1} parent=0 // pred_region
    _
  $region37: #{mlp_pallas.1} parent=0 // pred_fallthru
    _

</llo_original>
